<compile_context>
chip_gen: v7x
topology: tpu7x:2x2x1
jax: 0.10.0
libtpu: 0.0.40
codegen_flags: <defaults>
</compile_context>

<pallas_src>
import jax
import jax.numpy as jnp
from jax.experimental import pallas as pl
from jax.experimental.pallas import tpu as pltpu


def ocr_mlp_kernel(c_ref, qm_ref, w1_ref, b1_ref, w2_ref, b2_ref, o_ref):
    # Elementwise product (c * q_mean broadcast per row), VPU work that is
    # free under MXU slack.
    x = c_ref[...] * qm_ref[...]                                   # (R, D)

    # lin1 + ReLU (dropout p=0.0 -> identity)
    h = jnp.dot(x, w1_ref[...], preferred_element_type=jnp.float32) + b1_ref[...]
    h = jnp.maximum(h, 0.0)                                        # (R, M)

    # lin2 (padded to a lane-dense 128-wide output)
    y = jnp.dot(h, w2_ref[...], preferred_element_type=jnp.float32) + b2_ref[...]
    o_ref[...] = y.astype(o_ref.dtype)                             # (R, O_pad)


def ocr_classifier(c, q, q_mask, w1, b1, w2, b2):
    B, N, D = c.shape
    M = w1.shape[1]
    O = w2.shape[1]
    O_pad = ((O + 127) // 128) * 128        # lane-dense output width
    R = B * N                               # total rows fed to the MXU

    # --- hoisted masked mean (cheap; XLA fuses it) -------------------------
    # Same formula as the reference => bit-identical numerics.
    # NOTE: an all-zero mask row yields NaN/Inf, matching the PyTorch module.
    q_mean = (q * q_mask[:, :, None]).sum(1) / q_mask.sum(1)[:, None]   # (B, D)

    # --- flatten batch into rows ------------------------------------------
    c_rows = c.reshape(R, D)
    qmean_rows = jnp.broadcast_to(q_mean[:, None, :], (B, N, D)).reshape(R, D)

    # --- parameters: 2-D biases, lane-padded second layer ------------------
    b1_2d = b1.reshape(1, M)
    w2_pad = jnp.zeros((M, O_pad), w2.dtype).at[:, :O].set(w2)
    b2_pad = jnp.zeros((1, O_pad), b2.dtype).at[:, :O].set(b2.reshape(1, O))

    vmem_spec = pl.BlockSpec(memory_space=pltpu.MemorySpace.VMEM)
    out_pad = pl.pallas_call(
        ocr_mlp_kernel,
        out_shape=jax.ShapeDtypeStruct((R, O_pad), c.dtype),
        in_specs=[vmem_spec] * 6,
        out_specs=vmem_spec,
    )(c_rows, qmean_rows, w1, b1_2d, w2_pad, b2_pad)

    return out_pad[:, :O].reshape(B, N, O)


def ocr_classifier_ref(c, q, q_mask, w1, b1, w2, b2):
    q_mean = (q * q_mask[:, :, None]).sum(1) / q_mask.sum(1)[:, None]
    out = (c * q_mean[:, None, :]) @ w1 + b1
    out = jnp.maximum(out, 0.0)
    out = out @ w2 + b2
    return out


if __name__ == "__main__":
    B, N, L = 2, 8, 8
    in_features, mid_features, out_features = 32, 32, 1

    key = jax.random.PRNGKey(0)
    kc, kq, kw1, kb1, kw2, kb2 = jax.random.split(key, 6)

    c = jax.random.normal(kc, (B, N, in_features), dtype=jnp.float32)
    q = jax.random.normal(kq, (B, L, in_features), dtype=jnp.float32)
    # mask: first few tokens valid per batch (ensures nonzero denominator)
    lengths = jnp.array([5, 8], dtype=jnp.int32)
    q_mask = (jnp.arange(L)[None, :] < lengths[:, None]).astype(jnp.float32)

    # deterministic parameter init (Linear-like scaling)
    w1 = jax.random.normal(kw1, (in_features, mid_features), jnp.float32) / jnp.sqrt(in_features)
    b1 = jax.random.normal(kb1, (mid_features,), jnp.float32) * 0.01
    w2 = jax.random.normal(kw2, (mid_features, out_features), jnp.float32) / jnp.sqrt(mid_features)
    b2 = jax.random.normal(kb2, (out_features,), jnp.float32) * 0.01

    out = ocr_classifier(c, q, q_mask, w1, b1, w2, b2)
    out = jax.block_until_ready(out)

    ref = ocr_classifier_ref(c, q, q_mask, w1, b1, w2, b2)
    assert out.shape == (B, N, out_features)
    assert jnp.allclose(out, ref, atol=1e-5, rtol=1e-5), "mismatch vs reference"

    print("KERNEL_OK")
</pallas_src>

<mosaic_0001>
module attributes {stable_mosaic.version = 11 : i64} {
  func.func @ocr_mlp_kernel(%arg0: memref<16x32xf32, #tpu.memory_space<vmem>>, %arg1: memref<16x32xf32, #tpu.memory_space<vmem>>, %arg2: memref<32x32xf32, #tpu.memory_space<vmem>>, %arg3: memref<1x32xf32, #tpu.memory_space<vmem>>, %arg4: memref<32x128xf32, #tpu.memory_space<vmem>>, %arg5: memref<1x128xf32, #tpu.memory_space<vmem>>, %arg6: memref<16x128xf32, #tpu.memory_space<vmem>>) attributes {dimension_semantics = [], scalar_prefetch = 0 : i64, scratch_operands = 0 : i64, tpu.core_type = #tpu.core_type<tc>} {
    %c0 = arith.constant 0 : index
    %c0_0 = arith.constant 0 : index
    %0 = vector.load %arg0[%c0, %c0_0] : memref<16x32xf32, #tpu.memory_space<vmem>>, vector<16x32xf32>
    %c0_1 = arith.constant 0 : index
    %c0_2 = arith.constant 0 : index
    %1 = vector.load %arg1[%c0_1, %c0_2] : memref<16x32xf32, #tpu.memory_space<vmem>>, vector<16x32xf32>
    %2 = arith.mulf %0, %1 : vector<16x32xf32>
    %c0_3 = arith.constant 0 : index
    %c0_4 = arith.constant 0 : index
    %3 = vector.load %arg2[%c0_3, %c0_4] : memref<32x32xf32, #tpu.memory_space<vmem>>, vector<32x32xf32>
    %cst = arith.constant dense<0.000000e+00> : vector<16x32xf32>
    %4 = tpu.matmul %2, %3, %cst {dimension_numbers = #tpu.dot_dimension_numbers<[1], [0], [0], [1], [0, 0, 1, 1], [], []>} : vector<16x32xf32>, vector<32x32xf32>, vector<16x32xf32> -> vector<16x32xf32>
    %c0_5 = arith.constant 0 : index
    %c0_6 = arith.constant 0 : index
    %5 = vector.load %arg3[%c0_5, %c0_6] : memref<1x32xf32, #tpu.memory_space<vmem>>, vector<1x32xf32>
    %6 = vector.broadcast %5 : vector<1x32xf32> to vector<16x32xf32>
    %7 = arith.addf %4, %6 : vector<16x32xf32>
    %cst_7 = arith.constant 0.000000e+00 : f32
    %8 = vector.broadcast %cst_7 : f32 to vector<16x32xf32>
    %9 = arith.maximumf %7, %8 : vector<16x32xf32>
    %c0_8 = arith.constant 0 : index
    %c0_9 = arith.constant 0 : index
    %10 = vector.load %arg4[%c0_8, %c0_9] : memref<32x128xf32, #tpu.memory_space<vmem>>, vector<32x128xf32>
    %cst_10 = arith.constant dense<0.000000e+00> : vector<16x128xf32>
    %11 = tpu.matmul %9, %10, %cst_10 {dimension_numbers = #tpu.dot_dimension_numbers<[1], [0], [0], [1], [0, 0, 1, 1], [], []>} : vector<16x32xf32>, vector<32x128xf32>, vector<16x128xf32> -> vector<16x128xf32>
    %c0_11 = arith.constant 0 : index
    %c0_12 = arith.constant 0 : index
    %12 = vector.load %arg5[%c0_11, %c0_12] : memref<1x128xf32, #tpu.memory_space<vmem>>, vector<1x128xf32>
    %13 = vector.broadcast %12 : vector<1x128xf32> to vector<16x128xf32>
    %14 = arith.addf %11, %13 : vector<16x128xf32>
    %c0_13 = arith.constant 0 : index
    %c0_14 = arith.constant 0 : index
    %15 = vector.load %arg6[%c0_13, %c0_14] : memref<16x128xf32, #tpu.memory_space<vmem>>, vector<16x128xf32>
    tpu.vector_store %arg6[%c0_13, %c0_14], %14 {strides = array<i32>} : memref<16x128xf32, #tpu.memory_space<vmem>>, vector<16x128xf32>,
    return
  }
}

</mosaic_0001>

<llo_original>
// kernel: tpu_custom_call.1
$region0: #{tpu_custom_call.1}
  #allocation0 [shape = 'u32[]', space=smem, size = 0x4, offset = 0x4, fixed_abs, tag = 'smem constant byte address 0x4 - core index']
  #allocation1 [shape = 'u32[144,128]{1,0:T(1,128)}', space=vmem, size = 0x12000, scoped, tag = 'internal scratch']
  %s0 = inlined_call_operand.hbm [shape: f32[16,32], index: 0, kind: input, shape index: {}]
  %s1 = inlined_call_operand.hbm [shape: f32[16,32], index: 1, kind: input, shape index: {}]
  %s2 = inlined_call_operand.hbm [shape: f32[32,32], index: 2, kind: input, shape index: {}]
  %s3 = inlined_call_operand.vmem [shape: f32[1,32], index: 3, kind: input, shape index: {}]
  %s4 = inlined_call_operand.hbm [shape: f32[32,128], index: 4, kind: input, shape index: {}]
  %s5 = inlined_call_operand.vmem [shape: f32[1,128], index: 5, kind: input, shape index: {}]
  %s6 = inlined_call_operand.hbm [shape: f32[16,128], index: 6, kind: output, shape index: {}]
  %s7 = sld [smem:[#allocation0]]
  $region50: #{tpu_custom_call.1} parent=0
    _
  %s9 = ssub.s32 1, %s7
  %s10 = scalar_select 0, %s9, %s7
  $region1: #{tpu_custom_call.1} parent=0
    #allocation2 [shape = 'u8[8192]{0}', space=vmem, size = 0x2000, scoped, tag = 'input window, operand 0, single buffered']
    #allocation3 [shape = 's32[1]{0}', space=sflag, size = 0x4, scoped, tag = 'scoped memory for tpu_custom_call.1']
    #allocation4 [shape = 's32[1]{0}', space=sflag, size = 0x4, scoped, tag = 'scoped memory for tpu_custom_call.1']
    #allocation5 [shape = 'u8[8192]{0}', space=vmem, size = 0x2000, scoped, tag = 'input window, operand 1, single buffered']
    #allocation6 [shape = 's32[1]{0}', space=sflag, size = 0x4, scoped, tag = 'scoped memory for tpu_custom_call.1']
    #allocation7 [shape = 'u8[16384]{0}', space=vmem, size = 0x4000, scoped, tag = 'input window, operand 2, single buffered']
    #allocation8 [shape = 'u8[16384]{0}', space=vmem, size = 0x4000, scoped, tag = 'input window, operand 4, single buffered']
    #allocation9 [shape = 's32[1]{0}', space=sflag, size = 0x4, scoped, tag = 'scoped memory for tpu_custom_call.1']
    #allocation10 [shape = 'u8[8192]{0}', space=vmem, size = 0x2000, scoped, tag = 'output window, operand 0, single buffered']
    %11 = vsyncpa [#allocation3], 0
    %12 = vsyncpa [#allocation6], 0
    %13 = vsyncpa [#allocation9], 0
    %14 = vsyncpa [#allocation4], 0
    // Predicated region
    $region2: #{tpu_custom_call.1} parent=1 // pred_check
      _
    $region3: #{tpu_custom_call.1} parent=1 // pred_check_branch
      %16 = sbr.rel (0) target = $region5
    $region4: #{tpu_custom_call.1} parent=1 // pred_region
      %s18 = ssub.s32 256, 256
      %19 = vsyncadd [#allocation3], %s18
      %s20 = sshll.u32 [#allocation2], 4
      %s21 = int_to_ptr.vmem [resolvable:$true] %s20
      %26 = dma.hbm_to_vmem [thread:$0]  %s0, 256, %s21, [#allocation3], 128, 128, 8
    $region5: #{tpu_custom_call.1} parent=1 // pred_fallthru
      _
    // Predicated region
    $region6: #{tpu_custom_call.1} parent=1 // pred_check
      _
    $region7: #{tpu_custom_call.1} parent=1 // pred_check_branch
      %28 = sbr.rel (0) target = $region9
    $region8: #{tpu_custom_call.1} parent=1 // pred_region
      %s30 = ssub.s32 256, 256
      %31 = vsyncadd [#allocation6], %s30
      %s32 = sshll.u32 [#allocation5], 4
      %s33 = int_to_ptr.vmem [resolvable:$true] %s32
      %38 = dma.hbm_to_vmem [thread:$0]  %s1, 256, %s33, [#allocation6], 128, 128, 8
    $region9: #{tpu_custom_call.1} parent=1 // pred_fallthru
      _
    // Predicated region
    $region10: #{tpu_custom_call.1} parent=1 // pred_check
      _
    $region11: #{tpu_custom_call.1} parent=1 // pred_check_branch
      %40 = sbr.rel (0) target = $region13
    $region12: #{tpu_custom_call.1} parent=1 // pred_region
      %s42 = ssub.s32 512, 512
      %43 = vsyncadd [#allocation6], %s42
      %s44 = sshll.u32 [#allocation7], 4
      %s45 = int_to_ptr.vmem [resolvable:$true] %s44
      %50 = dma.hbm_to_vmem [thread:$0]  %s2, 512, %s45, [#allocation6], 128, 128, 8
    $region13: #{tpu_custom_call.1} parent=1 // pred_fallthru
      _
    // Predicated region
    $region14: #{tpu_custom_call.1} parent=1 // pred_check
      _
    $region15: #{tpu_custom_call.1} parent=1 // pred_check_branch
      %52 = sbr.rel (0) target = $region17
    $region16: #{tpu_custom_call.1} parent=1 // pred_region
      _
    $region17: #{tpu_custom_call.1} parent=1 // pred_fallthru
      _
    // Predicated region
    $region18: #{tpu_custom_call.1} parent=1 // pred_check
      _
    $region19: #{tpu_custom_call.1} parent=1 // pred_check_branch
      %54 = sbr.rel (0) target = $region21
    $region20: #{tpu_custom_call.1} parent=1 // pred_region
      %s56 = ssub.s32 512, 512
      %57 = vsyncadd [#allocation9], %s56
      %s58 = sshll.u32 [#allocation8], 4
      %s59 = int_to_ptr.vmem [resolvable:$true] %s58
      %64 = dma.hbm_to_vmem [thread:$0]  %s4, 512, %s59, [#allocation9], 128, 128, 8
    $region21: #{tpu_custom_call.1} parent=1 // pred_fallthru
      _
    // Predicated region
    $region22: #{tpu_custom_call.1} parent=1 // pred_check
      _
    $region23: #{tpu_custom_call.1} parent=1 // pred_check_branch
      %66 = sbr.rel (0) target = $region25
    $region24: #{tpu_custom_call.1} parent=1 // pred_region
      _
    $region25: #{tpu_custom_call.1} parent=1 // pred_fallthru
      _
    // Predicated region
    $region26: #{tpu_custom_call.1} parent=1 // pred_check
      _
    $region27: #{tpu_custom_call.1} parent=1 // pred_check_branch
      %68 = sbr.rel (0) target = $region29
    $region28: #{tpu_custom_call.1} parent=1 // pred_region
      %69 = dma.done [#allocation3], 256
    $region29: #{tpu_custom_call.1} parent=1 // pred_fallthru
      _
    // Predicated region
    $region30: #{tpu_custom_call.1} parent=1 // pred_check
      _
    $region31: #{tpu_custom_call.1} parent=1 // pred_check_branch
      %71 = sbr.rel (0) target = $region33
    $region32: #{tpu_custom_call.1} parent=1 // pred_region
      %72 = dma.done [#allocation6], 256
    $region33: #{tpu_custom_call.1} parent=1 // pred_fallthru
      _
    // Predicated region
    $region34: #{tpu_custom_call.1} parent=1 // pred_check
      _
    $region35: #{tpu_custom_call.1} parent=1 // pred_check_branch
      %74 = sbr.rel (0) target = $region37
    $region36: #{tpu_custom_call.1} parent=1 // pred_region
      %75 = dma.done [#allocation6], 512
    $region37: #{tpu_custom_call.1} parent=1 // pred_fallthru
      _
    // Predicated region
    $region38: #{tpu_custom_call.1} parent=1 // pred_check
      _
    $region39: #{tpu_custom_call.1} parent=1 // pred_check_branch
      %77 = sbr.rel (0) target = $region41
    $region40: #{tpu_custom_call.1} parent=1 // pred_region
      %78 = dma.done [#allocation9], 512
    $region41: #{tpu_custom_call.1} parent=1 // pred_fallthru
      _
    %v79 = vld [vmem:[#allocation2] sm:$0xff]
    %v80 = vld [vmem:[#allocation2 + $0x8] sm:$0xff]
    %v81 = vld [vmem:[#allocation5] sm:$0xff]
    %v82 = vld [vmem:[#allocation5 + $0x8] sm:$0xff]
    %v83 = vmul.f32 %v79, %v81
    %v84 = vmul.f32 %v80, %v82
    %v85 = vld [vmem:[#allocation7] sm:$0xff]
    %v86 = vld [vmem:[#allocation7 + $0x8] sm:$0xff]
    %v87 = vld [vmem:[#allocation7 + $0x10] sm:$0xff]
    %v88 = vld [vmem:[#allocation7 + $0x18] sm:$0xff]
    %v89 = vld [vmem:[%s3] sm:$0x1]
    %v91 = vlaneseq
    %v92 = vshrl.u32 %v91, 7
    %v93 = vsub.s32 0, %v92
    %v94 = vrot.slane %v89, %v93
    %vm96 = vcmask 261120
    %v98 = vsel %vm96, %v83, 0
    %v101 = vsel %vm96, %v84, 0
    %103 = vmatprep.subr.mxu0 0.0
    %104 = vmatpush1.msra.mxu0 %v85
    %105 = vmatprep.subr.mxu0 0.0
    %106 = vmatpush1.msra.mxu0 %v86
    %107 = vmatprep.subr.mxu0 0.0
    %108 = vmatpush1.msra.mxu0 %v87
    %109 = vmatprep.subr.mxu0 0.0
    %110 = vmatpush1.msra.mxu0 %v88
    %111 = vmatprep.subr.mxu0 0.0
    %112 = vmatpush1.msra.mxu0 0.0
    %113 = vmatprep.subr.mxu0 0.0
    %114 = vmatpush1.msra.mxu0 0.0
    %115 = vmatprep.subr.mxu0 0.0
    %116 = vmatpush1.msra.mxu0 0.0
    %117 = vmatprep.subr.mxu0 0.0
    %118 = vmatpush1.msra.mxu0 0.0
    %119 = vmatprep.subr.mxu0 0.0
    %120 = vmatpush1.msra.mxu0 0.0
    %121 = vmatprep.subr.mxu0 0.0
    %122 = vmatpush1.msra.mxu0 0.0
    %123 = vmatprep.subr.mxu0 0.0
    %124 = vmatpush1.msra.mxu0 0.0
    %125 = vmatprep.subr.mxu0 0.0
    %126 = vmatpush1.msra.mxu0 0.0
    %127 = vmatprep.subr.mxu0 0.0
    %128 = vmatpush1.msra.mxu0 0.0
    %129 = vmatprep.subr.mxu0 0.0
    %130 = vmatpush1.msra.mxu0 0.0
    %131 = vmatprep.subr.mxu0 0.0
    %132 = vmatpush1.msra.mxu0 0.0
    %133 = vmatprep.subr.mxu0 0.0
    %134 = vmatpush1.msra.mxu0 0.0
    %135 = vmatprep.subr.mxu0 0.0
    %136 = vmatpush1.msra.mxu0 0.0
    %137 = vmatprep.subr.mxu0 0.0
    %138 = vmatpush1.msra.mxu0 0.0
    %139 = vmatprep.subr.mxu0 0.0
    %140 = vmatpush1.msra.mxu0 0.0
    %141 = vmatprep.subr.mxu0 0.0
    %142 = vmatpush1.msra.mxu0 0.0
    %143 = vmatprep.subr.mxu0 0.0
    %144 = vmatpush1.msra.mxu0 0.0
    %145 = vmatprep.subr.mxu0 0.0
    %146 = vmatpush1.msra.mxu0 0.0
    %147 = vmatprep.subr.mxu0 0.0
    %148 = vmatpush1.msra.mxu0 0.0
    %149 = vmatprep.subr.mxu0 0.0
    %150 = vmatpush1.msra.mxu0 0.0
    %151 = vmatprep.subr.mxu0 0.0
    %152 = vmatpush1.msra.mxu0 0.0
    %153 = vmatprep.subr.mxu0 0.0
    %154 = vmatpush1.msra.mxu0 0.0
    %155 = vmatprep.subr.mxu0 0.0
    %156 = vmatpush1.msra.mxu0 0.0
    %157 = vmatprep.subr.mxu0 0.0
    %158 = vmatpush1.msra.mxu0 0.0
    %159 = vmatprep.subr.mxu0 0.0
    %160 = vmatpush1.msra.mxu0 0.0
    %161 = vmatprep.subr.mxu0 0.0
    %162 = vmatpush1.msra.mxu0 0.0
    %163 = vmatprep.subr.mxu0 0.0
    %164 = vmatpush1.msra.mxu0 0.0
    %165 = vmatprep.subr.mxu0 0.0
    %166 = vmatpush1.msra.mxu0 0.0
    %167 = vmatprep.mubr.f32.mxu0 0.0
    %168 = vmatmul.mubr.f32.gmra.mrb[0].mxu0 %v98
    %v169 = vpop.f32.mrb[0].mxu0
    %v170 = vadd.f32 %v94, %v169
    %v171 = vpop.f32.mrb[0].mxu0
    %172 = vmatprep.mubr.f32.mxu0 0.0
    %173 = vmatmul.mubr.f32.gmra.mrb[0].mxu0 %v101
    %v174 = vpop.f32.mrb[0].mxu0
    %v175 = vadd.f32 %v94, %v174
    %v176 = vpop.f32.mrb[0].mxu0
    %177 = vdwg.mxu0
    %v178 = vmax.f32 %v170, 0.0
    %v179 = vmax.f32 %v175, 0.0
    %v180 = vld [vmem:[#allocation8] sm:$0xff]
    %v181 = vld [vmem:[#allocation8 + $0x8] sm:$0xff]
    %v182 = vld [vmem:[#allocation8 + $0x10] sm:$0xff]
    %v183 = vld [vmem:[#allocation8 + $0x18] sm:$0xff]
    %v184 = vld [vmem:[%s5] sm:$0x1]
    %v186 = vlaneseq
    %v187 = vshrl.u32 %v186, 7
    %v188 = vsub.s32 0, %v187
    %v189 = vrot.slane %v184, %v188
    %v192 = vsel %vm96, %v178, 0
    %v195 = vsel %vm96, %v179, 0
    %197 = vmatprep.subr.mxu0 0.0
    %198 = vmatpush1.msra.mxu0 %v180
    %199 = vmatprep.subr.mxu0 0.0
    %200 = vmatpush1.msra.mxu0 %v181
    %201 = vmatprep.subr.mxu0 0.0
    %202 = vmatpush1.msra.mxu0 %v182
    %203 = vmatprep.subr.mxu0 0.0
    %204 = vmatpush1.msra.mxu0 %v183
    %205 = vmatprep.subr.mxu0 0.0
    %206 = vmatpush1.msra.mxu0 0.0
    %207 = vmatprep.subr.mxu0 0.0
    %208 = vmatpush1.msra.mxu0 0.0
    %209 = vmatprep.subr.mxu0 0.0
    %210 = vmatpush1.msra.mxu0 0.0
    %211 = vmatprep.subr.mxu0 0.0
    %212 = vmatpush1.msra.mxu0 0.0
    %213 = vmatprep.subr.mxu0 0.0
    %214 = vmatpush1.msra.mxu0 0.0
    %215 = vmatprep.subr.mxu0 0.0
    %216 = vmatpush1.msra.mxu0 0.0
    %217 = vmatprep.subr.mxu0 0.0
    %218 = vmatpush1.msra.mxu0 0.0
    %219 = vmatprep.subr.mxu0 0.0
    %220 = vmatpush1.msra.mxu0 0.0
    %221 = vmatprep.subr.mxu0 0.0
    %222 = vmatpush1.msra.mxu0 0.0
    %223 = vmatprep.subr.mxu0 0.0
    %224 = vmatpush1.msra.mxu0 0.0
    %225 = vmatprep.subr.mxu0 0.0
    %226 = vmatpush1.msra.mxu0 0.0
    %227 = vmatprep.subr.mxu0 0.0
    %228 = vmatpush1.msra.mxu0 0.0
    %229 = vmatprep.subr.mxu0 0.0
    %230 = vmatpush1.msra.mxu0 0.0
    %231 = vmatprep.subr.mxu0 0.0
    %232 = vmatpush1.msra.mxu0 0.0
    %233 = vmatprep.subr.mxu0 0.0
    %234 = vmatpush1.msra.mxu0 0.0
    %235 = vmatprep.subr.mxu0 0.0
    %236 = vmatpush1.msra.mxu0 0.0
    %237 = vmatprep.subr.mxu0 0.0
    %238 = vmatpush1.msra.mxu0 0.0
    %239 = vmatprep.subr.mxu0 0.0
    %240 = vmatpush1.msra.mxu0 0.0
    %241 = vmatprep.subr.mxu0 0.0
    %242 = vmatpush1.msra.mxu0 0.0
    %243 = vmatprep.subr.mxu0 0.0
    %244 = vmatpush1.msra.mxu0 0.0
    %245 = vmatprep.subr.mxu0 0.0
    %246 = vmatpush1.msra.mxu0 0.0
    %247 = vmatprep.subr.mxu0 0.0
    %248 = vmatpush1.msra.mxu0 0.0
    %249 = vmatprep.subr.mxu0 0.0
    %250 = vmatpush1.msra.mxu0 0.0
    %251 = vmatprep.subr.mxu0 0.0
    %252 = vmatpush1.msra.mxu0 0.0
    %253 = vmatprep.subr.mxu0 0.0
    %254 = vmatpush1.msra.mxu0 0.0
    %255 = vmatprep.subr.mxu0 0.0
    %256 = vmatpush1.msra.mxu0 0.0
    %257 = vmatprep.subr.mxu0 0.0
    %258 = vmatpush1.msra.mxu0 0.0
    %259 = vmatprep.subr.mxu0 0.0
    %260 = vmatpush1.msra.mxu0 0.0
    %261 = vmatprep.mubr.f32.mxu0 0.0
    %262 = vmatmul.mubr.f32.gmra.mrb[0].mxu0 %v192
    %v263 = vpop.f32.mrb[0].mxu0
    %v264 = vadd.f32 %v189, %v263
    %v265 = vpop.f32.mrb[0].mxu0
    %266 = vmatprep.mubr.f32.mxu0 0.0
    %267 = vmatmul.mubr.f32.gmra.mrb[0].mxu0 %v195
    %v268 = vpop.f32.mrb[0].mxu0
    %v269 = vadd.f32 %v189, %v268
    %v270 = vpop.f32.mrb[0].mxu0
    %271 = vdwg.mxu0
    %272 = vst [vmem:[#allocation10] sm:$0xff] %v264
    %273 = vst [vmem:[#allocation10 + $0x8] sm:$0xff] %v269
    // Predicated region
    $region42: #{tpu_custom_call.1} parent=1 // pred_check
      _
    $region43: #{tpu_custom_call.1} parent=1 // pred_check_branch
      %275 = sbr.rel (0) target = $region45
    $region44: #{tpu_custom_call.1} parent=1 // pred_region
      %s277 = ssub.s32 256, 256
      %278 = vsyncadd [#allocation4], %s277
      %s279 = sshll.u32 [#allocation10], 4
      %s280 = int_to_ptr.vmem [resolvable:$true] %s279
      %285 = dma.vmem_to_hbm [thread:$0]  %s280, 256, %s6, [#allocation4], 128, 128, 8
    $region45: #{tpu_custom_call.1} parent=1 // pred_fallthru
      _
    // Predicated region
    $region46: #{tpu_custom_call.1} parent=1 // pred_check
      _
    $region47: #{tpu_custom_call.1} parent=1 // pred_check_branch
      %287 = sbr.rel (0) target = $region49
    $region48: #{tpu_custom_call.1} parent=1 // pred_region
      %288 = dma.done [#allocation4], 256
    $region49: #{tpu_custom_call.1} parent=1 // pred_fallthru
      _
    %289 = vsyncpa [#allocation3], 1
    %290 = vsyncpa [#allocation6], 1
    %291 = vsyncpa [#allocation9], 1
    %292 = vsyncpa [#allocation4], 1

</llo_original>
